<compile_context>
chip_gen: v5e
topology: v5e:2x2
jax: 0.10.0
libtpu: 0.0.40
codegen_flags: <defaults>
</compile_context>

<pallas_src>
import functools
import math

import jax
import jax.numpy as jnp
from jax.experimental import pallas as pl
from jax.experimental.pallas import tpu as pltpu

N_NEURONS = 100          # matches the PyTorch module
LANE = 128               # vreg lane width: batch axis inside the kernel
H_PAD = 104              # hidden padded to the next multiple of 8 (>= 100)


def ffnn_kernel(x_ref, w1_ref, b1_ref, w2_ref, b2_ref, o_ref):
    # x_ref / o_ref : (rows, LANE)        batch along lanes (lane-dense)
    # w1_ref, b1_ref: (H_PAD, LANE)       hidden along sublanes, lane-replicated
    # w2_ref        : (1, H_PAD)          compact row for the MXU contraction
    # b2_ref        : (1, 1) scalar in SMEM
    w1 = w1_ref[...]
    b1 = b1_ref[...]
    w2 = w2_ref[...]
    b2 = b2_ref[0, 0]
    rows = x_ref.shape[0]
    for s in range(rows):                              # static unroll
        x_row = x_ref[s:s + 1, :]                      # (1, LANE)
        # Layer 1 + tanh: one (H_PAD, LANE) live block (13 vregs) per row.
        # VPU broadcast-mul/add + EUP tanh; no big 3-D temp, no spills.
        h_s = jnp.tanh(x_row * w1 + b1)                # (H_PAD, LANE)
        # Layer 2 on the (otherwise idle) MXU: (1,H_PAD) @ (H_PAD,LANE) -> (1,LANE)
        out_row = jnp.dot(w2, h_s, preferred_element_type=jnp.float32)
        o_ref[s:s + 1, :] = (out_row + b2).astype(o_ref.dtype)


def prepare_params(w1, b1, w2, b2):
    """Build the padded / replicated weight tiles once (reused across calls)."""
    hidden = w1.reshape(-1).shape[0]
    assert hidden <= H_PAD, "hidden must fit in the padded sublane tile"
    pad = H_PAD - hidden

    w1_col = jnp.pad(w1.reshape(-1).astype(jnp.float32), (0, pad))
    b1_col = jnp.pad(b1.reshape(-1).astype(jnp.float32), (0, pad))
    w2_row = jnp.pad(w2.reshape(-1).astype(jnp.float32), (0, pad))

    w1_t = jnp.broadcast_to(w1_col[:, None], (H_PAD, LANE))   # (H_PAD, LANE)
    b1_t = jnp.broadcast_to(b1_col[:, None], (H_PAD, LANE))   # (H_PAD, LANE)
    w2_t = w2_row[None, :]                                     # (1, H_PAD)
    b2_t = b2.reshape(1, 1).astype(jnp.float32)                # (1, 1) SMEM scalar
    return (jnp.asarray(w1_t), jnp.asarray(b1_t), jnp.asarray(w2_t), jnp.asarray(b2_t))


def default_rows_per_step(n):
    """1 grid step on single-TC v5e/v6e, >=2 parallel steps on dual-TC v7x."""
    try:
        kind = jax.devices()[0].device_kind.lower()
    except Exception:
        kind = ""
    dual_tc = "7" in kind                    # v7x: 2 TensorCores / chip
    n_rows = max(1, -(-n // LANE))
    target_steps = 2 if dual_tc else 1
    rows = -(-n_rows // target_steps)
    rows = -(-rows // 8) * 8                 # whole sublane tiles
    return int(min(max(rows, 8), 32))        # cap the in-kernel unroll


@functools.partial(jax.jit, static_argnames=("rows_per_step",))
def ffnn_forward(x, params, rows_per_step):
    w1_t, b1_t, w2_t, b2_t = params
    n = x.shape[0]
    chunk = rows_per_step * LANE
    n_pad = -(-n // chunk) * chunk           # ceil to a whole grid step
    n_rows = n_pad // LANE

    # Lane-dense input: batch along lanes, groups of 128 batch elems per sublane row.
    x2d = jnp.pad(x.reshape(-1).astype(jnp.float32), (0, n_pad - n)).reshape(n_rows, LANE)

    grid = (n_rows // rows_per_step,)
    out2d = pl.pallas_call(
        ffnn_kernel,
        out_shape=jax.ShapeDtypeStruct((n_rows, LANE), jnp.float32),
        grid=grid,
        in_specs=[
            pl.BlockSpec((rows_per_step, LANE), lambda i: (i, 0)),   # x tile
            pl.BlockSpec((H_PAD, LANE), lambda i: (0, 0)),           # W1 (resident)
            pl.BlockSpec((H_PAD, LANE), lambda i: (0, 0)),           # b1 (resident)
            pl.BlockSpec((1, H_PAD), lambda i: (0, 0)),              # W2 row (resident)
            pl.BlockSpec(memory_space=pltpu.MemorySpace.SMEM),       # b2 scalar
        ],
        out_specs=pl.BlockSpec((rows_per_step, LANE), lambda i: (i, 0)),
        compiler_params=pltpu.CompilerParams(
            dimension_semantics=("parallel",)),
    )(x2d, w1_t, b1_t, w2_t, b2_t)

    return out2d.reshape(n_pad, 1)[:n].astype(x.dtype)


def init_params(key, hidden=N_NEURONS, dtype=jnp.float32):
    # Deterministic init mirroring torch.nn.Linear: U(-1/sqrt(fan_in), 1/sqrt(fan_in))
    k1, k2, k3, k4 = jax.random.split(key, 4)
    bound1 = 1.0 / math.sqrt(1.0)       # l1: in_features = 1
    bound2 = 1.0 / math.sqrt(hidden)    # l2: in_features = hidden
    w1 = jax.random.uniform(k1, (1, hidden), dtype, -bound1, bound1)
    b1 = jax.random.uniform(k2, (hidden,), dtype, -bound1, bound1)
    w2 = jax.random.uniform(k3, (hidden, 1), dtype, -bound2, bound2)
    b2 = jax.random.uniform(k4, (1,), dtype, -bound2, bound2)
    return w1, b1, w2, b2


def reference_forward(x, w1, b1, w2, b2):
    h = jnp.tanh(x @ w1 + b1[None, :])
    return h @ w2 + b2[None, :]


if __name__ == "__main__":
    key = jax.random.PRNGKey(0)
    w1, b1, w2, b2 = init_params(key)
    params = prepare_params(w1, b1, w2, b2)       # hoisted: built once, reused

    # Same sizes as the PyTorch script: x is (2000, 1) float32 over [-pi, pi].
    n = 2000
    x = jnp.linspace(-math.pi, math.pi, n, dtype=jnp.float32)[:, None]

    rows_per_step = default_rows_per_step(n)
    out = ffnn_forward(x, params, rows_per_step=rows_per_step)
    out = jax.block_until_ready(out)

    ref = reference_forward(x, w1, b1, w2, b2)
    assert out.shape == (n, 1)
    assert jnp.allclose(out, ref, atol=1e-5, rtol=1e-5)

    print("KERNEL_OK")
</pallas_src>

<mosaic_0001>
module attributes {stable_mosaic.version = 11 : i64} {
  func.func @ffnn_kernel(%arg0: i32, %arg1: memref<16x128xf32, #tpu.memory_space<vmem>>, %arg2: memref<104x128xf32, #tpu.memory_space<vmem>>, %arg3: memref<104x128xf32, #tpu.memory_space<vmem>>, %arg4: memref<1x104xf32, #tpu.memory_space<vmem>>, %arg5: memref<1x1xf32, #tpu.memory_space<smem>>, %arg6: memref<16x128xf32, #tpu.memory_space<vmem>>) attributes {dimension_semantics = [#tpu.dimension_semantics<parallel>], iteration_bounds = array<i64: 1>, scalar_prefetch = 0 : i64, scratch_operands = 0 : i64, tpu.core_type = #tpu.core_type<tc>, window_params = [{transform_indices = @transform_0, window_bounds = array<i64: 16, 128>}, {pipeline_mode = #tpu.pipeline_mode<synchronous>, transform_indices = @transform_1, window_bounds = array<i64: 104, 128>}, {pipeline_mode = #tpu.pipeline_mode<synchronous>, transform_indices = @transform_2, window_bounds = array<i64: 104, 128>}, {pipeline_mode = #tpu.pipeline_mode<synchronous>, transform_indices = @transform_3, window_bounds = array<i64: 1, 104>}, {transform_indices = @transform_4, window_bounds = array<i64: 1, 1>}, {transform_indices = @transform_5, window_bounds = array<i64: 16, 128>}]} {
    %c0 = arith.constant 0 : index
    %c0_0 = arith.constant 0 : index
    %0 = vector.load %arg2[%c0, %c0_0] : memref<104x128xf32, #tpu.memory_space<vmem>>, vector<104x128xf32>
    %c0_1 = arith.constant 0 : index
    %c0_2 = arith.constant 0 : index
    %1 = vector.load %arg3[%c0_1, %c0_2] : memref<104x128xf32, #tpu.memory_space<vmem>>, vector<104x128xf32>
    %c0_3 = arith.constant 0 : index
    %c0_4 = arith.constant 0 : index
    %2 = vector.load %arg4[%c0_3, %c0_4] : memref<1x104xf32, #tpu.memory_space<vmem>>, vector<1x104xf32>
    %c0_5 = arith.constant 0 : index
    %c0_6 = arith.constant 0 : index
    %3 = memref.load %arg5[%c0_5, %c0_6] : memref<1x1xf32, #tpu.memory_space<smem>>
    %c0_7 = arith.constant 0 : index
    %c0_8 = arith.constant 0 : index
    %4 = vector.load %arg1[%c0_7, %c0_8] : memref<16x128xf32, #tpu.memory_space<vmem>>, vector<1x128xf32>
    %5 = vector.broadcast %4 : vector<1x128xf32> to vector<104x128xf32>
    %6 = arith.mulf %5, %0 : vector<104x128xf32>
    %7 = arith.addf %6, %1 : vector<104x128xf32>
    %8 = math.tanh %7 : vector<104x128xf32>
    %cst = arith.constant dense<0.000000e+00> : vector<1x128xf32>
    %9 = tpu.matmul %2, %8, %cst {dimension_numbers = #tpu.dot_dimension_numbers<[1], [0], [0], [1], [0, 0, 1, 1], [], []>} : vector<1x104xf32>, vector<104x128xf32>, vector<1x128xf32> -> vector<1x128xf32>
    %10 = vector.broadcast %3 : f32 to vector<1x128xf32>
    %11 = arith.addf %9, %10 : vector<1x128xf32>
    %c0_9 = arith.constant 0 : index
    %c0_10 = arith.constant 0 : index
    %12 = vector.load %arg6[%c0_9, %c0_10] : memref<16x128xf32, #tpu.memory_space<vmem>>, vector<1x128xf32>
    tpu.vector_store %arg6[%c0_9, %c0_10], %11 {strides = array<i32>} : memref<16x128xf32, #tpu.memory_space<vmem>>, vector<1x128xf32>,
    %c1 = arith.constant 1 : index
    %c0_11 = arith.constant 0 : index
    %13 = vector.load %arg1[%c1, %c0_11] : memref<16x128xf32, #tpu.memory_space<vmem>>, vector<1x128xf32>
    %14 = vector.broadcast %13 : vector<1x128xf32> to vector<104x128xf32>
    %15 = arith.mulf %14, %0 : vector<104x128xf32>
    %16 = arith.addf %15, %1 : vector<104x128xf32>
    %17 = math.tanh %16 : vector<104x128xf32>
    %cst_12 = arith.constant dense<0.000000e+00> : vector<1x128xf32>
    %18 = tpu.matmul %2, %17, %cst_12 {dimension_numbers = #tpu.dot_dimension_numbers<[1], [0], [0], [1], [0, 0, 1, 1], [], []>} : vector<1x104xf32>, vector<104x128xf32>, vector<1x128xf32> -> vector<1x128xf32>
    %19 = vector.broadcast %3 : f32 to vector<1x128xf32>
    %20 = arith.addf %18, %19 : vector<1x128xf32>
    %c1_13 = arith.constant 1 : index
    %c0_14 = arith.constant 0 : index
    %21 = vector.load %arg6[%c1_13, %c0_14] : memref<16x128xf32, #tpu.memory_space<vmem>>, vector<1x128xf32>
    tpu.vector_store %arg6[%c1_13, %c0_14], %20 {strides = array<i32>} : memref<16x128xf32, #tpu.memory_space<vmem>>, vector<1x128xf32>,
    %c2 = arith.constant 2 : index
    %c0_15 = arith.constant 0 : index
    %22 = vector.load %arg1[%c2, %c0_15] : memref<16x128xf32, #tpu.memory_space<vmem>>, vector<1x128xf32>
    %23 = vector.broadcast %22 : vector<1x128xf32> to vector<104x128xf32>
    %24 = arith.mulf %23, %0 : vector<104x128xf32>
    %25 = arith.addf %24, %1 : vector<104x128xf32>
    %26 = math.tanh %25 : vector<104x128xf32>
    %cst_16 = arith.constant dense<0.000000e+00> : vector<1x128xf32>
    %27 = tpu.matmul %2, %26, %cst_16 {dimension_numbers = #tpu.dot_dimension_numbers<[1], [0], [0], [1], [0, 0, 1, 1], [], []>} : vector<1x104xf32>, vector<104x128xf32>, vector<1x128xf32> -> vector<1x128xf32>
    %28 = vector.broadcast %3 : f32 to vector<1x128xf32>
    %29 = arith.addf %27, %28 : vector<1x128xf32>
    %c2_17 = arith.constant 2 : index
    %c0_18 = arith.constant 0 : index
    %30 = vector.load %arg6[%c2_17, %c0_18] : memref<16x128xf32, #tpu.memory_space<vmem>>, vector<1x128xf32>
    tpu.vector_store %arg6[%c2_17, %c0_18], %29 {strides = array<i32>} : memref<16x128xf32, #tpu.memory_space<vmem>>, vector<1x128xf32>,
    %c3 = arith.constant 3 : index
    %c0_19 = arith.constant 0 : index
    %31 = vector.load %arg1[%c3, %c0_19] : memref<16x128xf32, #tpu.memory_space<vmem>>, vector<1x128xf32>
    %32 = vector.broadcast %31 : vector<1x128xf32> to vector<104x128xf32>
    %33 = arith.mulf %32, %0 : vector<104x128xf32>
    %34 = arith.addf %33, %1 : vector<104x128xf32>
    %35 = math.tanh %34 : vector<104x128xf32>
    %cst_20 = arith.constant dense<0.000000e+00> : vector<1x128xf32>
    %36 = tpu.matmul %2, %35, %cst_20 {dimension_numbers = #tpu.dot_dimension_numbers<[1], [0], [0], [1], [0, 0, 1, 1], [], []>} : vector<1x104xf32>, vector<104x128xf32>, vector<1x128xf32> -> vector<1x128xf32>
    %37 = vector.broadcast %3 : f32 to vector<1x128xf32>
    %38 = arith.addf %36, %37 : vector<1x128xf32>
    %c3_21 = arith.constant 3 : index
    %c0_22 = arith.constant 0 : index
    %39 = vector.load %arg6[%c3_21, %c0_22] : memref<16x128xf32, #tpu.memory_space<vmem>>, vector<1x128xf32>
    tpu.vector_store %arg6[%c3_21, %c0_22], %38 {strides = array<i32>} : memref<16x128xf32, #tpu.memory_space<vmem>>, vector<1x128xf32>,
    %c4 = arith.constant 4 : index
    %c0_23 = arith.constant 0 : index
    %40 = vector.load %arg1[%c4, %c0_23] : memref<16x128xf32, #tpu.memory_space<vmem>>, vector<1x128xf32>
    %41 = vector.broadcast %40 : vector<1x128xf32> to vector<104x128xf32>
    %42 = arith.mulf %41, %0 : vector<104x128xf32>
    %43 = arith.addf %42, %1 : vector<104x128xf32>
    %44 = math.tanh %43 : vector<104x128xf32>
    %cst_24 = arith.constant dense<0.000000e+00> : vector<1x128xf32>
    %45 = tpu.matmul %2, %44, %cst_24 {dimension_numbers = #tpu.dot_dimension_numbers<[1], [0], [0], [1], [0, 0, 1, 1], [], []>} : vector<1x104xf32>, vector<104x128xf32>, vector<1x128xf32> -> vector<1x128xf32>
    %46 = vector.broadcast %3 : f32 to vector<1x128xf32>
    %47 = arith.addf %45, %46 : vector<1x128xf32>
    %c4_25 = arith.constant 4 : index
    %c0_26 = arith.constant 0 : index
    %48 = vector.load %arg6[%c4_25, %c0_26] : memref<16x128xf32, #tpu.memory_space<vmem>>, vector<1x128xf32>
    tpu.vector_store %arg6[%c4_25, %c0_26], %47 {strides = array<i32>} : memref<16x128xf32, #tpu.memory_space<vmem>>, vector<1x128xf32>,
    %c5 = arith.constant 5 : index
    %c0_27 = arith.constant 0 : index
    %49 = vector.load %arg1[%c5, %c0_27] : memref<16x128xf32, #tpu.memory_space<vmem>>, vector<1x128xf32>
    %50 = vector.broadcast %49 : vector<1x128xf32> to vector<104x128xf32>
    %51 = arith.mulf %50, %0 : vector<104x128xf32>
    %52 = arith.addf %51, %1 : vector<104x128xf32>
    %53 = math.tanh %52 : vector<104x128xf32>
    %cst_28 = arith.constant dense<0.000000e+00> : vector<1x128xf32>
    %54 = tpu.matmul %2, %53, %cst_28 {dimension_numbers = #tpu.dot_dimension_numbers<[1], [0], [0], [1], [0, 0, 1, 1], [], []>} : vector<1x104xf32>, vector<104x128xf32>, vector<1x128xf32> -> vector<1x128xf32>
    %55 = vector.broadcast %3 : f32 to vector<1x128xf32>
    %56 = arith.addf %54, %55 : vector<1x128xf32>
    %c5_29 = arith.constant 5 : index
    %c0_30 = arith.constant 0 : index
    %57 = vector.load %arg6[%c5_29, %c0_30] : memref<16x128xf32, #tpu.memory_space<vmem>>, vector<1x128xf32>
    tpu.vector_store %arg6[%c5_29, %c0_30], %56 {strides = array<i32>} : memref<16x128xf32, #tpu.memory_space<vmem>>, vector<1x128xf32>,
    %c6 = arith.constant 6 : index
    %c0_31 = arith.constant 0 : index
    %58 = vector.load %arg1[%c6, %c0_31] : memref<16x128xf32, #tpu.memory_space<vmem>>, vector<1x128xf32>
    %59 = vector.broadcast %58 : vector<1x128xf32> to vector<104x128xf32>
    %60 = arith.mulf %59, %0 : vector<104x128xf32>
    %61 = arith.addf %60, %1 : vector<104x128xf32>
    %62 = math.tanh %61 : vector<104x128xf32>
    %cst_32 = arith.constant dense<0.000000e+00> : vector<1x128xf32>
    %63 = tpu.matmul %2, %62, %cst_32 {dimension_numbers = #tpu.dot_dimension_numbers<[1], [0], [0], [1], [0, 0, 1, 1], [], []>} : vector<1x104xf32>, vector<104x128xf32>, vector<1x128xf32> -> vector<1x128xf32>
    %64 = vector.broadcast %3 : f32 to vector<1x128xf32>
    %65 = arith.addf %63, %64 : vector<1x128xf32>
    %c6_33 = arith.constant 6 : index
    %c0_34 = arith.constant 0 : index
    %66 = vector.load %arg6[%c6_33, %c0_34] : memref<16x128xf32, #tpu.memory_space<vmem>>, vector<1x128xf32>
    tpu.vector_store %arg6[%c6_33, %c0_34], %65 {strides = array<i32>} : memref<16x128xf32, #tpu.memory_space<vmem>>, vector<1x128xf32>,
    %c7 = arith.constant 7 : index
    %c0_35 = arith.constant 0 : index
    %67 = vector.load %arg1[%c7, %c0_35] : memref<16x128xf32, #tpu.memory_space<vmem>>, vector<1x128xf32>
    %68 = vector.broadcast %67 : vector<1x128xf32> to vector<104x128xf32>
    %69 = arith.mulf %68, %0 : vector<104x128xf32>
    %70 = arith.addf %69, %1 : vector<104x128xf32>
    %71 = math.tanh %70 : vector<104x128xf32>
    %cst_36 = arith.constant dense<0.000000e+00> : vector<1x128xf32>
    %72 = tpu.matmul %2, %71, %cst_36 {dimension_numbers = #tpu.dot_dimension_numbers<[1], [0], [0], [1], [0, 0, 1, 1], [], []>} : vector<1x104xf32>, vector<104x128xf32>, vector<1x128xf32> -> vector<1x128xf32>
    %73 = vector.broadcast %3 : f32 to vector<1x128xf32>
    %74 = arith.addf %72, %73 : vector<1x128xf32>
    %c7_37 = arith.constant 7 : index
    %c0_38 = arith.constant 0 : index
    %75 = vector.load %arg6[%c7_37, %c0_38] : memref<16x128xf32, #tpu.memory_space<vmem>>, vector<1x128xf32>
    tpu.vector_store %arg6[%c7_37, %c0_38], %74 {strides = array<i32>} : memref<16x128xf32, #tpu.memory_space<vmem>>, vector<1x128xf32>,
    %c8 = arith.constant 8 : index
    %c0_39 = arith.constant 0 : index
    %76 = vector.load %arg1[%c8, %c0_39] : memref<16x128xf32, #tpu.memory_space<vmem>>, vector<1x128xf32>
    %77 = vector.broadcast %76 : vector<1x128xf32> to vector<104x128xf32>
    %78 = arith.mulf %77, %0 : vector<104x128xf32>
    %79 = arith.addf %78, %1 : vector<104x128xf32>
    %80 = math.tanh %79 : vector<104x128xf32>
    %cst_40 = arith.constant dense<0.000000e+00> : vector<1x128xf32>
    %81 = tpu.matmul %2, %80, %cst_40 {dimension_numbers = #tpu.dot_dimension_numbers<[1], [0], [0], [1], [0, 0, 1, 1], [], []>} : vector<1x104xf32>, vector<104x128xf32>, vector<1x128xf32> -> vector<1x128xf32>
    %82 = vector.broadcast %3 : f32 to vector<1x128xf32>
    %83 = arith.addf %81, %82 : vector<1x128xf32>
    %c8_41 = arith.constant 8 : index
    %c0_42 = arith.constant 0 : index
    %84 = vector.load %arg6[%c8_41, %c0_42] : memref<16x128xf32, #tpu.memory_space<vmem>>, vector<1x128xf32>
    tpu.vector_store %arg6[%c8_41, %c0_42], %83 {strides = array<i32>} : memref<16x128xf32, #tpu.memory_space<vmem>>, vector<1x128xf32>,
    %c9 = arith.constant 9 : index
    %c0_43 = arith.constant 0 : index
    %85 = vector.load %arg1[%c9, %c0_43] : memref<16x128xf32, #tpu.memory_space<vmem>>, vector<1x128xf32>
    %86 = vector.broadcast %85 : vector<1x128xf32> to vector<104x128xf32>
    %87 = arith.mulf %86, %0 : vector<104x128xf32>
    %88 = arith.addf %87, %1 : vector<104x128xf32>
    %89 = math.tanh %88 : vector<104x128xf32>
    %cst_44 = arith.constant dense<0.000000e+00> : vector<1x128xf32>
    %90 = tpu.matmul %2, %89, %cst_44 {dimension_numbers = #tpu.dot_dimension_numbers<[1], [0], [0], [1], [0, 0, 1, 1], [], []>} : vector<1x104xf32>, vector<104x128xf32>, vector<1x128xf32> -> vector<1x128xf32>
    %91 = vector.broadcast %3 : f32 to vector<1x128xf32>
    %92 = arith.addf %90, %91 : vector<1x128xf32>
    %c9_45 = arith.constant 9 : index
    %c0_46 = arith.constant 0 : index
    %93 = vector.load %arg6[%c9_45, %c0_46] : memref<16x128xf32, #tpu.memory_space<vmem>>, vector<1x128xf32>
    tpu.vector_store %arg6[%c9_45, %c0_46], %92 {strides = array<i32>} : memref<16x128xf32, #tpu.memory_space<vmem>>, vector<1x128xf32>,
    %c10 = arith.constant 10 : index
    %c0_47 = arith.constant 0 : index
    %94 = vector.load %arg1[%c10, %c0_47] : memref<16x128xf32, #tpu.memory_space<vmem>>, vector<1x128xf32>
    %95 = vector.broadcast %94 : vector<1x128xf32> to vector<104x128xf32>
    %96 = arith.mulf %95, %0 : vector<104x128xf32>
    %97 = arith.addf %96, %1 : vector<104x128xf32>
    %98 = math.tanh %97 : vector<104x128xf32>
    %cst_48 = arith.constant dense<0.000000e+00> : vector<1x128xf32>
    %99 = tpu.matmul %2, %98, %cst_48 {dimension_numbers = #tpu.dot_dimension_numbers<[1], [0], [0], [1], [0, 0, 1, 1], [], []>} : vector<1x104xf32>, vector<104x128xf32>, vector<1x128xf32> -> vector<1x128xf32>
    %100 = vector.broadcast %3 : f32 to vector<1x128xf32>
    %101 = arith.addf %99, %100 : vector<1x128xf32>
    %c10_49 = arith.constant 10 : index
    %c0_50 = arith.constant 0 : index
    %102 = vector.load %arg6[%c10_49, %c0_50] : memref<16x128xf32, #tpu.memory_space<vmem>>, vector<1x128xf32>
    tpu.vector_store %arg6[%c10_49, %c0_50], %101 {strides = array<i32>} : memref<16x128xf32, #tpu.memory_space<vmem>>, vector<1x128xf32>,
    %c11 = arith.constant 11 : index
    %c0_51 = arith.constant 0 : index
    %103 = vector.load %arg1[%c11, %c0_51] : memref<16x128xf32, #tpu.memory_space<vmem>>, vector<1x128xf32>
    %104 = vector.broadcast %103 : vector<1x128xf32> to vector<104x128xf32>
    %105 = arith.mulf %104, %0 : vector<104x128xf32>
    %106 = arith.addf %105, %1 : vector<104x128xf32>
    %107 = math.tanh %106 : vector<104x128xf32>
    %cst_52 = arith.constant dense<0.000000e+00> : vector<1x128xf32>
    %108 = tpu.matmul %2, %107, %cst_52 {dimension_numbers = #tpu.dot_dimension_numbers<[1], [0], [0], [1], [0, 0, 1, 1], [], []>} : vector<1x104xf32>, vector<104x128xf32>, vector<1x128xf32> -> vector<1x128xf32>
    %109 = vector.broadcast %3 : f32 to vector<1x128xf32>
    %110 = arith.addf %108, %109 : vector<1x128xf32>
    %c11_53 = arith.constant 11 : index
    %c0_54 = arith.constant 0 : index
    %111 = vector.load %arg6[%c11_53, %c0_54] : memref<16x128xf32, #tpu.memory_space<vmem>>, vector<1x128xf32>
    tpu.vector_store %arg6[%c11_53, %c0_54], %110 {strides = array<i32>} : memref<16x128xf32, #tpu.memory_space<vmem>>, vector<1x128xf32>,
    %c12 = arith.constant 12 : index
    %c0_55 = arith.constant 0 : index
    %112 = vector.load %arg1[%c12, %c0_55] : memref<16x128xf32, #tpu.memory_space<vmem>>, vector<1x128xf32>
    %113 = vector.broadcast %112 : vector<1x128xf32> to vector<104x128xf32>
    %114 = arith.mulf %113, %0 : vector<104x128xf32>
    %115 = arith.addf %114, %1 : vector<104x128xf32>
    %116 = math.tanh %115 : vector<104x128xf32>
    %cst_56 = arith.constant dense<0.000000e+00> : vector<1x128xf32>
    %117 = tpu.matmul %2, %116, %cst_56 {dimension_numbers = #tpu.dot_dimension_numbers<[1], [0], [0], [1], [0, 0, 1, 1], [], []>} : vector<1x104xf32>, vector<104x128xf32>, vector<1x128xf32> -> vector<1x128xf32>
    %118 = vector.broadcast %3 : f32 to vector<1x128xf32>
    %119 = arith.addf %117, %118 : vector<1x128xf32>
    %c12_57 = arith.constant 12 : index
    %c0_58 = arith.constant 0 : index
    %120 = vector.load %arg6[%c12_57, %c0_58] : memref<16x128xf32, #tpu.memory_space<vmem>>, vector<1x128xf32>
    tpu.vector_store %arg6[%c12_57, %c0_58], %119 {strides = array<i32>} : memref<16x128xf32, #tpu.memory_space<vmem>>, vector<1x128xf32>,
    %c13 = arith.constant 13 : index
    %c0_59 = arith.constant 0 : index
    %121 = vector.load %arg1[%c13, %c0_59] : memref<16x128xf32, #tpu.memory_space<vmem>>, vector<1x128xf32>
    %122 = vector.broadcast %121 : vector<1x128xf32> to vector<104x128xf32>
    %123 = arith.mulf %122, %0 : vector<104x128xf32>
    %124 = arith.addf %123, %1 : vector<104x128xf32>
    %125 = math.tanh %124 : vector<104x128xf32>
    %cst_60 = arith.constant dense<0.000000e+00> : vector<1x128xf32>
    %126 = tpu.matmul %2, %125, %cst_60 {dimension_numbers = #tpu.dot_dimension_numbers<[1], [0], [0], [1], [0, 0, 1, 1], [], []>} : vector<1x104xf32>, vector<104x128xf32>, vector<1x128xf32> -> vector<1x128xf32>
    %127 = vector.broadcast %3 : f32 to vector<1x128xf32>
    %128 = arith.addf %126, %127 : vector<1x128xf32>
    %c13_61 = arith.constant 13 : index
    %c0_62 = arith.constant 0 : index
    %129 = vector.load %arg6[%c13_61, %c0_62] : memref<16x128xf32, #tpu.memory_space<vmem>>, vector<1x128xf32>
    tpu.vector_store %arg6[%c13_61, %c0_62], %128 {strides = array<i32>} : memref<16x128xf32, #tpu.memory_space<vmem>>, vector<1x128xf32>,
    %c14 = arith.constant 14 : index
    %c0_63 = arith.constant 0 : index
    %130 = vector.load %arg1[%c14, %c0_63] : memref<16x128xf32, #tpu.memory_space<vmem>>, vector<1x128xf32>
    %131 = vector.broadcast %130 : vector<1x128xf32> to vector<104x128xf32>
    %132 = arith.mulf %131, %0 : vector<104x128xf32>
    %133 = arith.addf %132, %1 : vector<104x128xf32>
    %134 = math.tanh %133 : vector<104x128xf32>
    %cst_64 = arith.constant dense<0.000000e+00> : vector<1x128xf32>
    %135 = tpu.matmul %2, %134, %cst_64 {dimension_numbers = #tpu.dot_dimension_numbers<[1], [0], [0], [1], [0, 0, 1, 1], [], []>} : vector<1x104xf32>, vector<104x128xf32>, vector<1x128xf32> -> vector<1x128xf32>
    %136 = vector.broadcast %3 : f32 to vector<1x128xf32>
    %137 = arith.addf %135, %136 : vector<1x128xf32>
    %c14_65 = arith.constant 14 : index
    %c0_66 = arith.constant 0 : index
    %138 = vector.load %arg6[%c14_65, %c0_66] : memref<16x128xf32, #tpu.memory_space<vmem>>, vector<1x128xf32>
    tpu.vector_store %arg6[%c14_65, %c0_66], %137 {strides = array<i32>} : memref<16x128xf32, #tpu.memory_space<vmem>>, vector<1x128xf32>,
    %c15 = arith.constant 15 : index
    %c0_67 = arith.constant 0 : index
    %139 = vector.load %arg1[%c15, %c0_67] : memref<16x128xf32, #tpu.memory_space<vmem>>, vector<1x128xf32>
    %140 = vector.broadcast %139 : vector<1x128xf32> to vector<104x128xf32>
    %141 = arith.mulf %140, %0 : vector<104x128xf32>
    %142 = arith.addf %141, %1 : vector<104x128xf32>
    %143 = math.tanh %142 : vector<104x128xf32>
    %cst_68 = arith.constant dense<0.000000e+00> : vector<1x128xf32>
    %144 = tpu.matmul %2, %143, %cst_68 {dimension_numbers = #tpu.dot_dimension_numbers<[1], [0], [0], [1], [0, 0, 1, 1], [], []>} : vector<1x104xf32>, vector<104x128xf32>, vector<1x128xf32> -> vector<1x128xf32>
    %145 = vector.broadcast %3 : f32 to vector<1x128xf32>
    %146 = arith.addf %144, %145 : vector<1x128xf32>
    %c15_69 = arith.constant 15 : index
    %c0_70 = arith.constant 0 : index
    %147 = vector.load %arg6[%c15_69, %c0_70] : memref<16x128xf32, #tpu.memory_space<vmem>>, vector<1x128xf32>
    tpu.vector_store %arg6[%c15_69, %c0_70], %146 {strides = array<i32>} : memref<16x128xf32, #tpu.memory_space<vmem>>, vector<1x128xf32>,
    return
  }
  func.func @transform_0(%arg0: i32) -> (i32, i32) {
    %c0_i32 = arith.constant 0 : i32
    %c0_i32_0 = arith.constant 0 : i32
    return %arg0, %c0_i32 : i32, i32
  }
  func.func @transform_1(%arg0: i32) -> (i32, i32) {
    %c0_i32 = arith.constant 0 : i32
    %c0_i32_0 = arith.constant 0 : i32
    %c0_i32_1 = arith.constant 0 : i32
    return %c0_i32, %c0_i32_0 : i32, i32
  }
  func.func @transform_2(%arg0: i32) -> (i32, i32) {
    %c0_i32 = arith.constant 0 : i32
    %c0_i32_0 = arith.constant 0 : i32
    %c0_i32_1 = arith.constant 0 : i32
    return %c0_i32, %c0_i32_0 : i32, i32
  }
  func.func @transform_3(%arg0: i32) -> (i32, i32) {
    %c0_i32 = arith.constant 0 : i32
    %c0_i32_0 = arith.constant 0 : i32
    %c0_i32_1 = arith.constant 0 : i32
    return %c0_i32, %c0_i32_0 : i32, i32
  }
  func.func @transform_4(%arg0: i32) -> (i32, i32) {
    %c0_i32 = arith.constant 0 : i32
    %c0_i32_0 = arith.constant 0 : i32
    %c0_i32_1 = arith.constant 0 : i32
    return %c0_i32, %c0_i32_0 : i32, i32
  }
  func.func @transform_5(%arg0: i32) -> (i32, i32) {
    %c0_i32 = arith.constant 0 : i32
    %c0_i32_0 = arith.constant 0 : i32
    return %arg0, %c0_i32 : i32, i32
  }
}

</mosaic_0001>

<llo_original>
// kernel: ffnn_forward.1
$region0: #{ffnn_forward.1}
  #allocation0 [shape = 'u32[]', space=smem, size = 0x4, offset = 0x4, fixed_abs, tag = 'smem constant byte address 0x4 - core index']
  #allocation1 [shape = 'u32[72,128]{1,0:T(1,128)}', space=vmem, size = 0x9000, scoped, tag = 'internal scratch']
  #allocation2 [shape = 'f32[1,1]{1,0:T(1,128)S(6)}', space=smem, size = 0x200, scoped, tag = 'scoped memory for ffnn_forward.1']
  %s0 = inlined_call_operand.vmem [shape: f32[16,128], index: 0, kind: input, shape index: {}]
  %s1 = inlined_call_operand.hbm [shape: f32[104,128], index: 1, kind: input, shape index: {}]
  %s2 = inlined_call_operand.hbm [shape: f32[104,128], index: 2, kind: input, shape index: {}]
  %s3 = inlined_call_operand.vmem [shape: f32[1,104], index: 3, kind: input, shape index: {}]
  %s4 = inlined_call_operand.<no memory space> [shape: f32[1,1], index: 4, kind: input, shape index: {}]
  %s5 = inlined_call_operand.hbm [shape: f32[16,128], index: 5, kind: output, shape index: {}]
  %s6 = sld [smem:[#allocation0]]
  $region38: #{ffnn_forward.1} parent=0
    _
  %s8 = ssub.s32 1, %s6
  %s9 = scalar_select 0, %s8, %s6
  %10 = sst [smem:[#allocation2]] %s4
  $region1: #{ffnn_forward.1} parent=0
    #allocation3 [shape = 'u8[53248]{0}', space=vmem, size = 0xd000, scoped, tag = 'input window, operand 1, single buffered']
    #allocation4 [shape = 's32[1]{0}', space=sflag, size = 0x4, scoped, tag = 'scoped memory for ffnn_forward.1']
    #allocation5 [shape = 's32[1]{0}', space=sflag, size = 0x4, scoped, tag = 'scoped memory for ffnn_forward.1']
    #allocation6 [shape = 'u8[53248]{0}', space=vmem, size = 0xd000, scoped, tag = 'input window, operand 2, single buffered']
    #allocation7 [shape = 's32[1]{0}', space=sflag, size = 0x4, scoped, tag = 'scoped memory for ffnn_forward.1']
    #allocation8 [shape = 'u8[8192]{0}', space=vmem, size = 0x2000, scoped, tag = 'output window, operand 0, single buffered']
    %11 = vsyncpa [#allocation4], 0
    %12 = vsyncpa [#allocation7], 0
    %13 = vsyncpa [#allocation5], 0
    // Predicated region
    $region2: #{ffnn_forward.1} parent=1 // pred_check
      _
    $region3: #{ffnn_forward.1} parent=1 // pred_check_branch
      %15 = sbr.rel (0) target = $region5
    $region4: #{ffnn_forward.1} parent=1 // pred_region
      _
    $region5: #{ffnn_forward.1} parent=1 // pred_fallthru
      _
    // Predicated region
    $region6: #{ffnn_forward.1} parent=1 // pred_check
      _
    $region7: #{ffnn_forward.1} parent=1 // pred_check_branch
      %17 = sbr.rel (0) target = $region9
    $region8: #{ffnn_forward.1} parent=1 // pred_region
      %19 = vsyncadd [#allocation4], 0
      %s20 = sshll.u32 %s1, 4
      %s21 = int_to_ptr.hbm [resolvable:$true] %s20
      %s22 = sshll.u32 [#allocation3], 4
      %s23 = int_to_ptr.vmem [resolvable:$true] %s22
      %28 = dma.hbm_to_vmem [thread:$0]  %s21, 1664, %s23, [#allocation4], 128, 128, 8
    $region9: #{ffnn_forward.1} parent=1 // pred_fallthru
      _
    // Predicated region
    $region10: #{ffnn_forward.1} parent=1 // pred_check
      _
    $region11: #{ffnn_forward.1} parent=1 // pred_check_branch
      %30 = sbr.rel (0) target = $region13
    $region12: #{ffnn_forward.1} parent=1 // pred_region
      %32 = vsyncadd [#allocation7], 0
      %s33 = sshll.u32 %s2, 4
      %s34 = int_to_ptr.hbm [resolvable:$true] %s33
      %s35 = sshll.u32 [#allocation6], 4
      %s36 = int_to_ptr.vmem [resolvable:$true] %s35
      %41 = dma.hbm_to_vmem [thread:$0]  %s34, 1664, %s36, [#allocation7], 128, 128, 8
    $region13: #{ffnn_forward.1} parent=1 // pred_fallthru
      _
    // Predicated region
    $region14: #{ffnn_forward.1} parent=1 // pred_check
      _
    $region15: #{ffnn_forward.1} parent=1 // pred_check_branch
      %43 = sbr.rel (0) target = $region17
    $region16: #{ffnn_forward.1} parent=1 // pred_region
      _
    $region17: #{ffnn_forward.1} parent=1 // pred_fallthru
      _
    // Predicated region
    $region18: #{ffnn_forward.1} parent=1 // pred_check
      _
    $region19: #{ffnn_forward.1} parent=1 // pred_check_branch
      %45 = sbr.rel (0) target = $region21
    $region20: #{ffnn_forward.1} parent=1 // pred_region
      _
    $region21: #{ffnn_forward.1} parent=1 // pred_fallthru
      _
    // Predicated region
    $region22: #{ffnn_forward.1} parent=1 // pred_check
      _
    $region23: #{ffnn_forward.1} parent=1 // pred_check_branch
      %47 = sbr.rel (0) target = $region25
    $region24: #{ffnn_forward.1} parent=1 // pred_region
      %49 = dma.done [#allocation4], 1664
    $region25: #{ffnn_forward.1} parent=1 // pred_fallthru
      _
    // Predicated region
    $region26: #{ffnn_forward.1} parent=1 // pred_check
      _
    $region27: #{ffnn_forward.1} parent=1 // pred_check_branch
      %51 = sbr.rel (0) target = $region29
    $region28: #{ffnn_forward.1} parent=1 // pred_region
      %53 = dma.done [#allocation7], 1664
    $region29: #{ffnn_forward.1} parent=1 // pred_fallthru
      _
    %v54 = vld [vmem:[#allocation3] sm:$0xff]
    %v55 = vld [vmem:[#allocation3 + $0x8] sm:$0xff]
    %v56 = vld [vmem:[#allocation3 + $0x10] sm:$0xff]
    %v57 = vld [vmem:[#allocation3 + $0x18] sm:$0xff]
    %v58 = vld [vmem:[#allocation3 + $0x20] sm:$0xff]
    %v59 = vld [vmem:[#allocation3 + $0x28] sm:$0xff]
    %v60 = vld [vmem:[#allocation3 + $0x30] sm:$0xff]
    %v61 = vld [vmem:[#allocation3 + $0x38] sm:$0xff]
    %v62 = vld [vmem:[#allocation3 + $0x40] sm:$0xff]
    %v63 = vld [vmem:[#allocation3 + $0x48] sm:$0xff]
    %v64 = vld [vmem:[#allocation3 + $0x50] sm:$0xff]
    %v65 = vld [vmem:[#allocation3 + $0x58] sm:$0xff]
    %v66 = vld [vmem:[#allocation3 + $0x60] sm:$0xff]
    %v67 = vld [vmem:[#allocation6] sm:$0xff]
    %v68 = vld [vmem:[#allocation6 + $0x8] sm:$0xff]
    %v69 = vld [vmem:[#allocation6 + $0x10] sm:$0xff]
    %v70 = vld [vmem:[#allocation6 + $0x18] sm:$0xff]
    %v71 = vld [vmem:[#allocation6 + $0x20] sm:$0xff]
    %v72 = vld [vmem:[#allocation6 + $0x28] sm:$0xff]
    %v73 = vld [vmem:[#allocation6 + $0x30] sm:$0xff]
    %v74 = vld [vmem:[#allocation6 + $0x38] sm:$0xff]
    %v75 = vld [vmem:[#allocation6 + $0x40] sm:$0xff]
    %v76 = vld [vmem:[#allocation6 + $0x48] sm:$0xff]
    %v77 = vld [vmem:[#allocation6 + $0x50] sm:$0xff]
    %v78 = vld [vmem:[#allocation6 + $0x58] sm:$0xff]
    %v79 = vld [vmem:[#allocation6 + $0x60] sm:$0xff]
    %v80 = vld [vmem:[%s3] sm:$0x1]
    %s81 = sld [smem:[#allocation2]]
    %v82 = vld [vmem:[%s0] sm:$0x1]
    %v83 = vperm.slane %v82, 0
    %v84 = vmul.f32 %v83, %v54
    %v85 = vmul.f32 %v83, %v55
    %v86 = vmul.f32 %v83, %v56
    %v87 = vmul.f32 %v83, %v57
    %v88 = vmul.f32 %v83, %v58
    %v89 = vmul.f32 %v83, %v59
    %v90 = vmul.f32 %v83, %v60
    %v91 = vmul.f32 %v83, %v61
    %v92 = vmul.f32 %v83, %v62
    %v93 = vmul.f32 %v83, %v63
    %v94 = vmul.f32 %v83, %v64
    %v95 = vmul.f32 %v83, %v65
    %v96 = vmul.f32 %v83, %v66
    %v97 = vadd.f32 %v84, %v67
    %v98 = vadd.f32 %v85, %v68
    %v99 = vadd.f32 %v86, %v69
    %v100 = vadd.f32 %v87, %v70
    %v101 = vadd.f32 %v88, %v71
    %v102 = vadd.f32 %v89, %v72
    %v103 = vadd.f32 %v90, %v73
    %v104 = vadd.f32 %v91, %v74
    %v105 = vadd.f32 %v92, %v75
    %v106 = vadd.f32 %v93, %v76
    %v107 = vadd.f32 %v94, %v77
    %v108 = vadd.f32 %v95, %v78
    %v109 = vadd.f32 %v96, %v79
    %v110 = vtanh.pop %v97
    %v111 = vtanh.pop %v98
    %v112 = vtanh.pop %v99
    %v113 = vtanh.pop %v100
    %v114 = vtanh.pop %v101
    %v115 = vtanh.pop %v102
    %v116 = vtanh.pop %v103
    %v117 = vtanh.pop %v104
    %v118 = vtanh.pop %v105
    %v119 = vtanh.pop %v106
    %v120 = vtanh.pop %v107
    %v121 = vtanh.pop %v108
    %v122 = vtanh.pop %v109
    %v123 = vstv %s81
    %vm124 = vcmask 850944
    %v126 = vsel %vm124, %v80, 0
    %128 = vmatpush.msra.mxu0 0.0
    %129 = vmatpush.msra.mxu0 0.0
    %130 = vmatpush.msra.mxu0 0.0
    %131 = vmatpush.msra.mxu0 %v122
    %132 = vmatpush.msra.mxu0 %v121
    %133 = vmatpush.msra.mxu0 %v120
    %134 = vmatpush.msra.mxu0 %v119
    %135 = vmatpush.msra.mxu0 %v118
    %136 = vmatpush.msra.mxu0 %v117
    %137 = vmatpush.msra.mxu0 %v116
    %138 = vmatpush.msra.mxu0 %v115
    %139 = vmatpush.msra.mxu0 %v114
    %140 = vmatpush.msra.mxu0 %v113
    %141 = vmatpush.msra.mxu0 %v112
    %142 = vmatpush.msra.mxu0 %v111
    %143 = vmatpush.msra.mxu0 %v110
    %144 = vmatmul.f32.gmra.mxu0 %v126
    %v145 = vpop.f32.mrf.mxu0
    %v146 = vadd.f32 %v123, %v145
    %147 = vdwg.mxu0
    %148 = vst [vmem:[#allocation8] sm:$0x1] %v146
    %v149 = vld [vmem:[%s0 + $0x1] sm:$0x1]
    %v150 = vperm.slane %v149, 0
    %v151 = vmul.f32 %v150, %v54
    %v152 = vmul.f32 %v150, %v55
    %v153 = vmul.f32 %v150, %v56
    %v154 = vmul.f32 %v150, %v57
    %v155 = vmul.f32 %v150, %v58
    %v156 = vmul.f32 %v150, %v59
    %v157 = vmul.f32 %v150, %v60
    %v158 = vmul.f32 %v150, %v61
    %v159 = vmul.f32 %v150, %v62
    %v160 = vmul.f32 %v150, %v63
    %v161 = vmul.f32 %v150, %v64
    %v162 = vmul.f32 %v150, %v65
    %v163 = vmul.f32 %v150, %v66
    %v164 = vadd.f32 %v151, %v67
    %v165 = vadd.f32 %v152, %v68
    %v166 = vadd.f32 %v153, %v69
    %v167 = vadd.f32 %v154, %v70
    %v168 = vadd.f32 %v155, %v71
    %v169 = vadd.f32 %v156, %v72
    %v170 = vadd.f32 %v157, %v73
    %v171 = vadd.f32 %v158, %v74
    %v172 = vadd.f32 %v159, %v75
    %v173 = vadd.f32 %v160, %v76
    %v174 = vadd.f32 %v161, %v77
    %v175 = vadd.f32 %v162, %v78
    %v176 = vadd.f32 %v163, %v79
    %v177 = vtanh.pop %v164
    %v178 = vtanh.pop %v165
    %v179 = vtanh.pop %v166
    %v180 = vtanh.pop %v167
    %v181 = vtanh.pop %v168
    %v182 = vtanh.pop %v169
    %v183 = vtanh.pop %v170
    %v184 = vtanh.pop %v171
    %v185 = vtanh.pop %v172
    %v186 = vtanh.pop %v173
    %v187 = vtanh.pop %v174
    %v188 = vtanh.pop %v175
    %v189 = vtanh.pop %v176
    %190 = vmatpush.msra.mxu0 0.0
    %191 = vmatpush.msra.mxu0 0.0
    %192 = vmatpush.msra.mxu0 0.0
    %193 = vmatpush.msra.mxu0 %v189
    %194 = vmatpush.msra.mxu0 %v188
    %195 = vmatpush.msra.mxu0 %v187
    %196 = vmatpush.msra.mxu0 %v186
    %197 = vmatpush.msra.mxu0 %v185
    %198 = vmatpush.msra.mxu0 %v184
    %199 = vmatpush.msra.mxu0 %v183
    %200 = vmatpush.msra.mxu0 %v182
    %201 = vmatpush.msra.mxu0 %v181
    %202 = vmatpush.msra.mxu0 %v180
    %203 = vmatpush.msra.mxu0 %v179
    %204 = vmatpush.msra.mxu0 %v178
    %205 = vmatpush.msra.mxu0 %v177
    %206 = vmatmul.f32.gmra.mxu0 %v126
    %v207 = vpop.f32.mrf.mxu0
    %v208 = vadd.f32 %v123, %v207
    %209 = vdwg.mxu0
    %210 = vst [vmem:[#allocation8 + $0x1] sm:$0x1] %v208
    %v211 = vld [vmem:[%s0 + $0x2] sm:$0x1]
    %v212 = vperm.slane %v211, 0
    %v213 = vmul.f32 %v212, %v54
    %v214 = vmul.f32 %v212, %v55
    %v215 = vmul.f32 %v212, %v56
    %v216 = vmul.f32 %v212, %v57
    %v217 = vmul.f32 %v212, %v58
    %v218 = vmul.f32 %v212, %v59
    %v219 = vmul.f32 %v212, %v60
    %v220 = vmul.f32 %v212, %v61
    %v221 = vmul.f32 %v212, %v62
    %v222 = vmul.f32 %v212, %v63
    %v223 = vmul.f32 %v212, %v64
    %v224 = vmul.f32 %v212, %v65
    %v225 = vmul.f32 %v212, %v66
    %v226 = vadd.f32 %v213, %v67
    %v227 = vadd.f32 %v214, %v68
    %v228 = vadd.f32 %v215, %v69
    %v229 = vadd.f32 %v216, %v70
    %v230 = vadd.f32 %v217, %v71
    %v231 = vadd.f32 %v218, %v72
    %v232 = vadd.f32 %v219, %v73
    %v233 = vadd.f32 %v220, %v74
    %v234 = vadd.f32 %v221, %v75
    %v235 = vadd.f32 %v222, %v76
    %v236 = vadd.f32 %v223, %v77
    %v237 = vadd.f32 %v224, %v78
    %v238 = vadd.f32 %v225, %v79
    %v239 = vtanh.pop %v226
    %v240 = vtanh.pop %v227
    %v241 = vtanh.pop %v228
    %v242 = vtanh.pop %v229
    %v243 = vtanh.pop %v230
    %v244 = vtanh.pop %v231
    %v245 = vtanh.pop %v232
    %v246 = vtanh.pop %v233
    %v247 = vtanh.pop %v234
    %v248 = vtanh.pop %v235
    %v249 = vtanh.pop %v236
    %v250 = vtanh.pop %v237
    %v251 = vtanh.pop %v238
    %252 = vmatpush.msra.mxu0 0.0
    %253 = vmatpush.msra.mxu0 0.0
    %254 = vmatpush.msra.mxu0 0.0
    %255 = vmatpush.msra.mxu0 %v251
    %256 = vmatpush.msra.mxu0 %v250
    %257 = vmatpush.msra.mxu0 %v249
    %258 = vmatpush.msra.mxu0 %v248
    %259 = vmatpush.msra.mxu0 %v247
    %260 = vmatpush.msra.mxu0 %v246
    %261 = vmatpush.msra.mxu0 %v245
    %262 = vmatpush.msra.mxu0 %v244
    %263 = vmatpush.msra.mxu0 %v243
    %264 = vmatpush.msra.mxu0 %v242
    %265 = vmatpush.msra.mxu0 %v241
    %266 = vmatpush.msra.mxu0 %v240
    %267 = vmatpush.msra.mxu0 %v239
    %268 = vmatmul.f32.gmra.mxu0 %v126
    %v269 = vpop.f32.mrf.mxu0
    %v270 = vadd.f32 %v123, %v269
    %271 = vdwg.mxu0
    %272 = vst [vmem:[#allocation8 + $0x2] sm:$0x1] %v270
    %v273 = vld [vmem:[%s0 + $0x3] sm:$0x1]
    %v274 = vperm.slane %v273, 0
    %v275 = vmul.f32 %v274, %v54
    %v276 = vmul.f32 %v274, %v55
    %v277 = vmul.f32 %v274, %v56
    %v278 = vmul.f32 %v274, %v57
    %v279 = vmul.f32 %v274, %v58
    %v280 = vmul.f32 %v274, %v59
    %v281 = vmul.f32 %v274, %v60
    %v282 = vmul.f32 %v274, %v61
    %v283 = vmul.f32 %v274, %v62
    %v284 = vmul.f32 %v274, %v63
    %v285 = vmul.f32 %v274, %v64
    %v286 = vmul.f32 %v274, %v65
    %v287 = vmul.f32 %v274, %v66
    %v288 = vadd.f32 %v275, %v67
    %v289 = vadd.f32 %v276, %v68
    %v290 = vadd.f32 %v277, %v69
    %v291 = vadd.f32 %v278, %v70
    %v292 = vadd.f32 %v279, %v71
    %v293 = vadd.f32 %v280, %v72
    %v294 = vadd.f32 %v281, %v73
    %v295 = vadd.f32 %v282, %v74
    %v296 = vadd.f32 %v283, %v75
    %v297 = vadd.f32 %v284, %v76
    %v298 = vadd.f32 %v285, %v77
    %v299 = vadd.f32 %v286, %v78
    %v300 = vadd.f32 %v287, %v79
    %v301 = vtanh.pop %v288
    %v302 = vtanh.pop %v289
    %v303 = vtanh.pop %v290
    %v304 = vtanh.pop %v291
    %v305 = vtanh.pop %v292
    %v306 = vtanh.pop %v293
    %v307 = vtanh.pop %v294
    %v308 = vtanh.pop %v295
    %v309 = vtanh.pop %v296
    %v310 = vtanh.pop %v297
    %v311 = vtanh.pop %v298
    %v312 = vtanh.pop %v299
    %v313 = vtanh.pop %v300
    %314 = vmatpush.msra.mxu0 0.0
    %315 = vmatpush.msra.mxu0 0.0
    %316 = vmatpush.msra.mxu0 0.0
    %317 = vmatpush.msra.mxu0 %v313
    %318 = vmatpush.msra.mxu0 %v312
    %319 = vmatpush.msra.mxu0 %v311
    %320 = vmatpush.msra.mxu0 %v310
    %321 = vmatpush.msra.mxu0 %v309
    %322 = vmatpush.msra.mxu0 %v308
    %323 = vmatpush.msra.mxu0 %v307
    %324 = vmatpush.msra.mxu0 %v306
    %325 = vmatpush.msra.mxu0 %v305
    %326 = vmatpush.msra.mxu0 %v304
    %327 = vmatpush.msra.mxu0 %v303
    %328 = vmatpush.msra.mxu0 %v302
    %329 = vmatpush.msra.mxu0 %v301
    %330 = vmatmul.f32.gmra.mxu0 %v126
    %v331 = vpop.f32.mrf.mxu0
    %v332 = vadd.f32 %v123, %v331
    %333 = vdwg.mxu0
    %334 = vst [vmem:[#allocation8 + $0x3] sm:$0x1] %v332
    %v335 = vld [vmem:[%s0 + $0x4] sm:$0x1]
    %v336 = vperm.slane %v335, 0
    %v337 = vmul.f32 %v336, %v54
    %v338 = vmul.f32 %v336, %v55
    %v339 = vmul.f32 %v336, %v56
    %v340 = vmul.f32 %v336, %v57
    %v341 = vmul.f32 %v336, %v58
    %v342 = vmul.f32 %v336, %v59
    %v343 = vmul.f32 %v336, %v60
    %v344 = vmul.f32 %v336, %v61
    %v345 = vmul.f32 %v336, %v62
    %v346 = vmul.f32 %v336, %v63
    %v347 = vmul.f32 %v336, %v64
    %v348 = vmul.f32 %v336, %v65
    %v349 = vmul.f32 %v336, %v66
    %v350 = vadd.f32 %v337, %v67
    %v351 = vadd.f32 %v338, %v68
    %v352 = vadd.f32 %v339, %v69
    %v353 = vadd.f32 %v340, %v70
    %v354 = vadd.f32 %v341, %v71
    %v355 = vadd.f32 %v342, %v72
    %v356 = vadd.f32 %v343, %v73
    %v357 = vadd.f32 %v344, %v74
    %v358 = vadd.f32 %v345, %v75
    %v359 = vadd.f32 %v346, %v76
    %v360 = vadd.f32 %v347, %v77
    %v361 = vadd.f32 %v348, %v78
    %v362 = vadd.f32 %v349, %v79
    %v363 = vtanh.pop %v350
    %v364 = vtanh.pop %v351
    %v365 = vtanh.pop %v352
    %v366 = vtanh.pop %v353
    %v367 = vtanh.pop %v354
    %v368 = vtanh.pop %v355
    %v369 = vtanh.pop %v356
    %v370 = vtanh.pop %v357
    %v371 = vtanh.pop %v358
    %v372 = vtanh.pop %v359
    %v373 = vtanh.pop %v360
    %v374 = vtanh.pop %v361
    %v375 = vtanh.pop %v362
    %376 = vmatpush.msra.mxu0 0.0
    %377 = vmatpush.msra.mxu0 0.0
    %378 = vmatpush.msra.mxu0 0.0
    %379 = vmatpush.msra.mxu0 %v375
    %380 = vmatpush.msra.mxu0 %v374
    %381 = vmatpush.msra.mxu0 %v373
    %382 = vmatpush.msra.mxu0 %v372
    %383 = vmatpush.msra.mxu0 %v371
    %384 = vmatpush.msra.mxu0 %v370
    %385 = vmatpush.msra.mxu0 %v369
    %386 = vmatpush.msra.mxu0 %v368
    %387 = vmatpush.msra.mxu0 %v367
    %388 = vmatpush.msra.mxu0 %v366
    %389 = vmatpush.msra.mxu0 %v365
    %390 = vmatpush.msra.mxu0 %v364
    %391 = vmatpush.msra.mxu0 %v363
    %392 = vmatmul.f32.gmra.mxu0 %v126
    %v393 = vpop.f32.mrf.mxu0
    %v394 = vadd.f32 %v123, %v393
    %395 = vdwg.mxu0
    %396 = vst [vmem:[#allocation8 + $0x4] sm:$0x1] %v394
    %v397 = vld [vmem:[%s0 + $0x5] sm:$0x1]
    %v398 = vperm.slane %v397, 0
    %v399 = vmul.f32 %v398, %v54
    %v400 = vmul.f32 %v398, %v55
    %v401 = vmul.f32 %v398, %v56
    %v402 = vmul.f32 %v398, %v57
    %v403 = vmul.f32 %v398, %v58
    %v404 = vmul.f32 %v398, %v59
    %v405 = vmul.f32 %v398, %v60
    %v406 = vmul.f32 %v398, %v61
    %v407 = vmul.f32 %v398, %v62
    %v408 = vmul.f32 %v398, %v63
    %v409 = vmul.f32 %v398, %v64
    %v410 = vmul.f32 %v398, %v65
    %v411 = vmul.f32 %v398, %v66
    %v412 = vadd.f32 %v399, %v67
    %v413 = vadd.f32 %v400, %v68
    %v414 = vadd.f32 %v401, %v69
    %v415 = vadd.f32 %v402, %v70
    %v416 = vadd.f32 %v403, %v71
    %v417 = vadd.f32 %v404, %v72
    %v418 = vadd.f32 %v405, %v73
    %v419 = vadd.f32 %v406, %v74
    %v420 = vadd.f32 %v407, %v75
    %v421 = vadd.f32 %v408, %v76
    %v422 = vadd.f32 %v409, %v77
    %v423 = vadd.f32 %v410, %v78
    %v424 = vadd.f32 %v411, %v79
    %v425 = vtanh.pop %v412
    %v426 = vtanh.pop %v413
    %v427 = vtanh.pop %v414
    %v428 = vtanh.pop %v415
    %v429 = vtanh.pop %v416
    %v430 = vtanh.pop %v417
    %v431 = vtanh.pop %v418
    %v432 = vtanh.pop %v419
    %v433 = vtanh.pop %v420
    %v434 = vtanh.pop %v421
    %v435 = vtanh.pop %v422
    %v436 = vtanh.pop %v423
    %v437 = vtanh.pop %v424
    %438 = vmatpush.msra.mxu0 0.0
    %439 = vmatpush.msra.mxu0 0.0
    %440 = vmatpush.msra.mxu0 0.0
    %441 = vmatpush.msra.mxu0 %v437
    %442 = vmatpush.msra.mxu0 %v436
    %443 = vmatpush.msra.mxu0 %v435
    %444 = vmatpush.msra.mxu0 %v434
    %445 = vmatpush.msra.mxu0 %v433
    %446 = vmatpush.msra.mxu0 %v432
    %447 = vmatpush.msra.mxu0 %v431
    %448 = vmatpush.msra.mxu0 %v430
    %449 = vmatpush.msra.mxu0 %v429
    %450 = vmatpush.msra.mxu0 %v428
    %451 = vmatpush.msra.mxu0 %v427
    %452 = vmatpush.msra.mxu0 %v426
    %453 = vmatpush.msra.mxu0 %v425
    %454 = vmatmul.f32.gmra.mxu0 %v126
    %v455 = vpop.f32.mrf.mxu0
    %v456 = vadd.f32 %v123, %v455
    %457 = vdwg.mxu0
    %458 = vst [vmem:[#allocation8 + $0x5] sm:$0x1] %v456
    %v459 = vld [vmem:[%s0 + $0x6] sm:$0x1]
    %v460 = vperm.slane %v459, 0
    %v461 = vmul.f32 %v460, %v54
    %v462 = vmul.f32 %v460, %v55
    %v463 = vmul.f32 %v460, %v56
    %v464 = vmul.f32 %v460, %v57
    %v465 = vmul.f32 %v460, %v58
    %v466 = vmul.f32 %v460, %v59
    %v467 = vmul.f32 %v460, %v60
    %v468 = vmul.f32 %v460, %v61
    %v469 = vmul.f32 %v460, %v62
    %v470 = vmul.f32 %v460, %v63
    %v471 = vmul.f32 %v460, %v64
    %v472 = vmul.f32 %v460, %v65
    %v473 = vmul.f32 %v460, %v66
    %v474 = vadd.f32 %v461, %v67
    %v475 = vadd.f32 %v462, %v68
    %v476 = vadd.f32 %v463, %v69
    %v477 = vadd.f32 %v464, %v70
    %v478 = vadd.f32 %v465, %v71
    %v479 = vadd.f32 %v466, %v72
    %v480 = vadd.f32 %v467, %v73
    %v481 = vadd.f32 %v468, %v74
    %v482 = vadd.f32 %v469, %v75
    %v483 = vadd.f32 %v470, %v76
    %v484 = vadd.f32 %v471, %v77
    %v485 = vadd.f32 %v472, %v78
    %v486 = vadd.f32 %v473, %v79
    %v487 = vtanh.pop %v474
    %v488 = vtanh.pop %v475
    %v489 = vtanh.pop %v476
    %v490 = vtanh.pop %v477
    %v491 = vtanh.pop %v478
    %v492 = vtanh.pop %v479
    %v493 = vtanh.pop %v480
    %v494 = vtanh.pop %v481
    %v495 = vtanh.pop %v482
    %v496 = vtanh.pop %v483
    %v497 = vtanh.pop %v484
    %v498 = vtanh.pop %v485
    %v499 = vtanh.pop %v486
    %500 = vmatpush.msra.mxu0 0.0
    %501 = vmatpush.msra.mxu0 0.0
    %502 = vmatpush.msra.mxu0 0.0
    %503 = vmatpush.msra.mxu0 %v499
    %504 = vmatpush.msra.mxu0 %v498
    %505 = vmatpush.msra.mxu0 %v497
    %506 = vmatpush.msra.mxu0 %v496
    %507 = vmatpush.msra.mxu0 %v495
    %508 = vmatpush.msra.mxu0 %v494
    %509 = vmatpush.msra.mxu0 %v493
    %510 = vmatpush.msra.mxu0 %v492
    %511 = vmatpush.msra.mxu0 %v491
    %512 = vmatpush.msra.mxu0 %v490
    %513 = vmatpush.msra.mxu0 %v489
    %514 = vmatpush.msra.mxu0 %v488
    %515 = vmatpush.msra.mxu0 %v487
    %516 = vmatmul.f32.gmra.mxu0 %v126
    %v517 = vpop.f32.mrf.mxu0
    %v518 = vadd.f32 %v123, %v517
    %519 = vdwg.mxu0
    %520 = vst [vmem:[#allocation8 + $0x6] sm:$0x1] %v518
    %v521 = vld [vmem:[%s0 + $0x7] sm:$0x1]
    %v522 = vperm.slane %v521, 0
    %v523 = vmul.f32 %v522, %v54
    %v524 = vmul.f32 %v522, %v55
    %v525 = vmul.f32 %v522, %v56
    %v526 = vmul.f32 %v522, %v57
    %v527 = vmul.f32 %v522, %v58
    %v528 = vmul.f32 %v522, %v59
    %v529 = vmul.f32 %v522, %v60
    %v530 = vmul.f32 %v522, %v61
    %v531 = vmul.f32 %v522, %v62
    %v532 = vmul.f32 %v522, %v63
    %v533 = vmul.f32 %v522, %v64
    %v534 = vmul.f32 %v522, %v65
    %v535 = vmul.f32 %v522, %v66
    %v536 = vadd.f32 %v523, %v67
    %v537 = vadd.f32 %v524, %v68
    %v538 = vadd.f32 %v525, %v69
    %v539 = vadd.f32 %v526, %v70
    %v540 = vadd.f32 %v527, %v71
    %v541 = vadd.f32 %v528, %v72
    %v542 = vadd.f32 %v529, %v73
    %v543 = vadd.f32 %v530, %v74
    %v544 = vadd.f32 %v531, %v75
    %v545 = vadd.f32 %v532, %v76
    %v546 = vadd.f32 %v533, %v77
    %v547 = vadd.f32 %v534, %v78
    %v548 = vadd.f32 %v535, %v79
    %v549 = vtanh.pop %v536
    %v550 = vtanh.pop %v537
    %v551 = vtanh.pop %v538
    %v552 = vtanh.pop %v539
    %v553 = vtanh.pop %v540
    %v554 = vtanh.pop %v541
    %v555 = vtanh.pop %v542
    %v556 = vtanh.pop %v543
    %v557 = vtanh.pop %v544
    %v558 = vtanh.pop %v545
    %v559 = vtanh.pop %v546
    %v560 = vtanh.pop %v547
    %v561 = vtanh.pop %v548
    %562 = vmatpush.msra.mxu0 0.0
    %563 = vmatpush.msra.mxu0 0.0
    %564 = vmatpush.msra.mxu0 0.0
    %565 = vmatpush.msra.mxu0 %v561
    %566 = vmatpush.msra.mxu0 %v560
    %567 = vmatpush.msra.mxu0 %v559
    %568 = vmatpush.msra.mxu0 %v558
    %569 = vmatpush.msra.mxu0 %v557
    %570 = vmatpush.msra.mxu0 %v556
    %571 = vmatpush.msra.mxu0 %v555
    %572 = vmatpush.msra.mxu0 %v554
    %573 = vmatpush.msra.mxu0 %v553
    %574 = vmatpush.msra.mxu0 %v552
    %575 = vmatpush.msra.mxu0 %v551
    %576 = vmatpush.msra.mxu0 %v550
    %577 = vmatpush.msra.mxu0 %v549
    %578 = vmatmul.f32.gmra.mxu0 %v126
    %v579 = vpop.f32.mrf.mxu0
    %v580 = vadd.f32 %v123, %v579
    %581 = vdwg.mxu0
    %582 = vst [vmem:[#allocation8 + $0x7] sm:$0x1] %v580
    %v583 = vld [vmem:[%s0 + $0x8] sm:$0x1]
    %v584 = vperm.slane %v583, 0
    %v585 = vmul.f32 %v584, %v54
    %v586 = vmul.f32 %v584, %v55
    %v587 = vmul.f32 %v584, %v56
    %v588 = vmul.f32 %v584, %v57
    %v589 = vmul.f32 %v584, %v58
    %v590 = vmul.f32 %v584, %v59
    %v591 = vmul.f32 %v584, %v60
    %v592 = vmul.f32 %v584, %v61
    %v593 = vmul.f32 %v584, %v62
    %v594 = vmul.f32 %v584, %v63
    %v595 = vmul.f32 %v584, %v64
    %v596 = vmul.f32 %v584, %v65
    %v597 = vmul.f32 %v584, %v66
    %v598 = vadd.f32 %v585, %v67
    %v599 = vadd.f32 %v586, %v68
    %v600 = vadd.f32 %v587, %v69
    %v601 = vadd.f32 %v588, %v70
    %v602 = vadd.f32 %v589, %v71
    %v603 = vadd.f32 %v590, %v72
    %v604 = vadd.f32 %v591, %v73
    %v605 = vadd.f32 %v592, %v74
    %v606 = vadd.f32 %v593, %v75
    %v607 = vadd.f32 %v594, %v76
    %v608 = vadd.f32 %v595, %v77
    %v609 = vadd.f32 %v596, %v78
    %v610 = vadd.f32 %v597, %v79
    %v611 = vtanh.pop %v598
    %v612 = vtanh.pop %v599
    %v613 = vtanh.pop %v600
    %v614 = vtanh.pop %v601
    %v615 = vtanh.pop %v602
    %v616 = vtanh.pop %v603
    %v617 = vtanh.pop %v604
    %v618 = vtanh.pop %v605
    %v619 = vtanh.pop %v606
    %v620 = vtanh.pop %v607
    %v621 = vtanh.pop %v608
    %v622 = vtanh.pop %v609
    %v623 = vtanh.pop %v610
    %624 = vmatpush.msra.mxu0 0.0
    %625 = vmatpush.msra.mxu0 0.0
    %626 = vmatpush.msra.mxu0 0.0
    %627 = vmatpush.msra.mxu0 %v623
    %628 = vmatpush.msra.mxu0 %v622
    %629 = vmatpush.msra.mxu0 %v621
    %630 = vmatpush.msra.mxu0 %v620
    %631 = vmatpush.msra.mxu0 %v619
    %632 = vmatpush.msra.mxu0 %v618
    %633 = vmatpush.msra.mxu0 %v617
    %634 = vmatpush.msra.mxu0 %v616
    %635 = vmatpush.msra.mxu0 %v615
    %636 = vmatpush.msra.mxu0 %v614
    %637 = vmatpush.msra.mxu0 %v613
    %638 = vmatpush.msra.mxu0 %v612
    %639 = vmatpush.msra.mxu0 %v611
    %640 = vmatmul.f32.gmra.mxu0 %v126
    %v641 = vpop.f32.mrf.mxu0
    %v642 = vadd.f32 %v123, %v641
    %643 = vdwg.mxu0
    %644 = vst [vmem:[#allocation8 + $0x8] sm:$0x1] %v642
    %v645 = vld [vmem:[%s0 + $0x9] sm:$0x1]
    %v646 = vperm.slane %v645, 0
    %v647 = vmul.f32 %v646, %v54
    %v648 = vmul.f32 %v646, %v55
    %v649 = vmul.f32 %v646, %v56
    %v650 = vmul.f32 %v646, %v57
    %v651 = vmul.f32 %v646, %v58
    %v652 = vmul.f32 %v646, %v59
    %v653 = vmul.f32 %v646, %v60
    %v654 = vmul.f32 %v646, %v61
    %v655 = vmul.f32 %v646, %v62
    %v656 = vmul.f32 %v646, %v63
    %v657 = vmul.f32 %v646, %v64
    %v658 = vmul.f32 %v646, %v65
    %v659 = vmul.f32 %v646, %v66
    %v660 = vadd.f32 %v647, %v67
    %v661 = vadd.f32 %v648, %v68
    %v662 = vadd.f32 %v649, %v69
    %v663 = vadd.f32 %v650, %v70
    %v664 = vadd.f32 %v651, %v71
    %v665 = vadd.f32 %v652, %v72
    %v666 = vadd.f32 %v653, %v73
    %v667 = vadd.f32 %v654, %v74
    %v668 = vadd.f32 %v655, %v75
    %v669 = vadd.f32 %v656, %v76
    %v670 = vadd.f32 %v657, %v77
    %v671 = vadd.f32 %v658, %v78
    %v672 = vadd.f32 %v659, %v79
    %v673 = vtanh.pop %v660
    %v674 = vtanh.pop %v661
    %v675 = vtanh.pop %v662
    %v676 = vtanh.pop %v663
    %v677 = vtanh.pop %v664
    %v678 = vtanh.pop %v665
    %v679 = vtanh.pop %v666
    %v680 = vtanh.pop %v667
    %v681 = vtanh.pop %v668
    %v682 = vtanh.pop %v669
    %v683 = vtanh.pop %v670
    %v684 = vtanh.pop %v671
    %v685 = vtanh.pop %v672
    %686 = vmatpush.msra.mxu0 0.0
    %687 = vmatpush.msra.mxu0 0.0
    %688 = vmatpush.msra.mxu0 0.0
    %689 = vmatpush.msra.mxu0 %v685
    %690 = vmatpush.msra.mxu0 %v684
    %691 = vmatpush.msra.mxu0 %v683
    %692 = vmatpush.msra.mxu0 %v682
    %693 = vmatpush.msra.mxu0 %v681
    %694 = vmatpush.msra.mxu0 %v680
    %695 = vmatpush.msra.mxu0 %v679
    %696 = vmatpush.msra.mxu0 %v678
    %697 = vmatpush.msra.mxu0 %v677
    %698 = vmatpush.msra.mxu0 %v676
    %699 = vmatpush.msra.mxu0 %v675
    %700 = vmatpush.msra.mxu0 %v674
    %701 = vmatpush.msra.mxu0 %v673
    %702 = vmatmul.f32.gmra.mxu0 %v126
    %v703 = vpop.f32.mrf.mxu0
    %v704 = vadd.f32 %v123, %v703
    %705 = vdwg.mxu0
    %706 = vst [vmem:[#allocation8 + $0x9] sm:$0x1] %v704
    %v707 = vld [vmem:[%s0 + $0xa] sm:$0x1]
    %v708 = vperm.slane %v707, 0
    %v709 = vmul.f32 %v708, %v54
    %v710 = vmul.f32 %v708, %v55
    %v711 = vmul.f32 %v708, %v56
    %v712 = vmul.f32 %v708, %v57
    %v713 = vmul.f32 %v708, %v58
    %v714 = vmul.f32 %v708, %v59
    %v715 = vmul.f32 %v708, %v60
    %v716 = vmul.f32 %v708, %v61
    %v717 = vmul.f32 %v708, %v62
    %v718 = vmul.f32 %v708, %v63
    %v719 = vmul.f32 %v708, %v64
    %v720 = vmul.f32 %v708, %v65
    %v721 = vmul.f32 %v708, %v66
    %v722 = vadd.f32 %v709, %v67
    %v723 = vadd.f32 %v710, %v68
    %v724 = vadd.f32 %v711, %v69
    %v725 = vadd.f32 %v712, %v70
    %v726 = vadd.f32 %v713, %v71
    %v727 = vadd.f32 %v714, %v72
    %v728 = vadd.f32 %v715, %v73
    %v729 = vadd.f32 %v716, %v74
    %v730 = vadd.f32 %v717, %v75
    %v731 = vadd.f32 %v718, %v76
    %v732 = vadd.f32 %v719, %v77
    %v733 = vadd.f32 %v720, %v78
    %v734 = vadd.f32 %v721, %v79
    %v735 = vtanh.pop %v722
    %v736 = vtanh.pop %v723
    %v737 = vtanh.pop %v724
    %v738 = vtanh.pop %v725
    %v739 = vtanh.pop %v726
    %v740 = vtanh.pop %v727
    %v741 = vtanh.pop %v728
    %v742 = vtanh.pop %v729
    %v743 = vtanh.pop %v730
    %v744 = vtanh.pop %v731
    %v745 = vtanh.pop %v732
    %v746 = vtanh.pop %v733
    %v747 = vtanh.pop %v734
    %748 = vmatpush.msra.mxu0 0.0
    %749 = vmatpush.msra.mxu0 0.0
    %750 = vmatpush.msra.mxu0 0.0
    %751 = vmatpush.msra.mxu0 %v747
    %752 = vmatpush.msra.mxu0 %v746
    %753 = vmatpush.msra.mxu0 %v745
    %754 = vmatpush.msra.mxu0 %v744
    %755 = vmatpush.msra.mxu0 %v743
    %756 = vmatpush.msra.mxu0 %v742
    %757 = vmatpush.msra.mxu0 %v741
    %758 = vmatpush.msra.mxu0 %v740
    %759 = vmatpush.msra.mxu0 %v739
    %760 = vmatpush.msra.mxu0 %v738
    %761 = vmatpush.msra.mxu0 %v737
    %762 = vmatpush.msra.mxu0 %v736
    %763 = vmatpush.msra.mxu0 %v735
    %764 = vmatmul.f32.gmra.mxu0 %v126
    %v765 = vpop.f32.mrf.mxu0
    %v766 = vadd.f32 %v123, %v765
    %767 = vdwg.mxu0
    %768 = vst [vmem:[#allocation8 + $0xa] sm:$0x1] %v766
    %v769 = vld [vmem:[%s0 + $0xb] sm:$0x1]
    %v770 = vperm.slane %v769, 0
    %v771 = vmul.f32 %v770, %v54
    %v772 = vmul.f32 %v770, %v55
    %v773 = vmul.f32 %v770, %v56
    %v774 = vmul.f32 %v770, %v57
    %v775 = vmul.f32 %v770, %v58
    %v776 = vmul.f32 %v770, %v59
    %v777 = vmul.f32 %v770, %v60
    %v778 = vmul.f32 %v770, %v61
    %v779 = vmul.f32 %v770, %v62
    %v780 = vmul.f32 %v770, %v63
    %v781 = vmul.f32 %v770, %v64
    %v782 = vmul.f32 %v770, %v65
    %v783 = vmul.f32 %v770, %v66
    %v784 = vadd.f32 %v771, %v67
    %v785 = vadd.f32 %v772, %v68
    %v786 = vadd.f32 %v773, %v69
    %v787 = vadd.f32 %v774, %v70
    %v788 = vadd.f32 %v775, %v71
    %v789 = vadd.f32 %v776, %v72
    %v790 = vadd.f32 %v777, %v73
    %v791 = vadd.f32 %v778, %v74
    %v792 = vadd.f32 %v779, %v75
    %v793 = vadd.f32 %v780, %v76
    %v794 = vadd.f32 %v781, %v77
    %v795 = vadd.f32 %v782, %v78
    %v796 = vadd.f32 %v783, %v79
    %v797 = vtanh.pop %v784
    %v798 = vtanh.pop %v785
    %v799 = vtanh.pop %v786
    %v800 = vtanh.pop %v787
    %v801 = vtanh.pop %v788
    %v802 = vtanh.pop %v789
    %v803 = vtanh.pop %v790
    %v804 = vtanh.pop %v791
    %v805 = vtanh.pop %v792
    %v806 = vtanh.pop %v793
    %v807 = vtanh.pop %v794
    %v808 = vtanh.pop %v795
    %v809 = vtanh.pop %v796
    %810 = vmatpush.msra.mxu0 0.0
    %811 = vmatpush.msra.mxu0 0.0
    %812 = vmatpush.msra.mxu0 0.0
    %813 = vmatpush.msra.mxu0 %v809
    %814 = vmatpush.msra.mxu0 %v808
    %815 = vmatpush.msra.mxu0 %v807
    %816 = vmatpush.msra.mxu0 %v806
    %817 = vmatpush.msra.mxu0 %v805
    %818 = vmatpush.msra.mxu0 %v804
    %819 = vmatpush.msra.mxu0 %v803
    %820 = vmatpush.msra.mxu0 %v802
    %821 = vmatpush.msra.mxu0 %v801
    %822 = vmatpush.msra.mxu0 %v800
    %823 = vmatpush.msra.mxu0 %v799
    %824 = vmatpush.msra.mxu0 %v798
    %825 = vmatpush.msra.mxu0 %v797
    %826 = vmatmul.f32.gmra.mxu0 %v126
    %v827 = vpop.f32.mrf.mxu0
    %v828 = vadd.f32 %v123, %v827
    %829 = vdwg.mxu0
    %830 = vst [vmem:[#allocation8 + $0xb] sm:$0x1] %v828
    %v831 = vld [vmem:[%s0 + $0xc] sm:$0x1]
    %v832 = vperm.slane %v831, 0
    %v833 = vmul.f32 %v832, %v54
    %v834 = vmul.f32 %v832, %v55
    %v835 = vmul.f32 %v832, %v56
    %v836 = vmul.f32 %v832, %v57
    %v837 = vmul.f32 %v832, %v58
    %v838 = vmul.f32 %v832, %v59
    %v839 = vmul.f32 %v832, %v60
    %v840 = vmul.f32 %v832, %v61
    %v841 = vmul.f32 %v832, %v62
    %v842 = vmul.f32 %v832, %v63
    %v843 = vmul.f32 %v832, %v64
    %v844 = vmul.f32 %v832, %v65
    %v845 = vmul.f32 %v832, %v66
    %v846 = vadd.f32 %v833, %v67
    %v847 = vadd.f32 %v834, %v68
    %v848 = vadd.f32 %v835, %v69
    %v849 = vadd.f32 %v836, %v70
    %v850 = vadd.f32 %v837, %v71
    %v851 = vadd.f32 %v838, %v72
    %v852 = vadd.f32 %v839, %v73
    %v853 = vadd.f32 %v840, %v74
    %v854 = vadd.f32 %v841, %v75
    %v855 = vadd.f32 %v842, %v76
    %v856 = vadd.f32 %v843, %v77
    %v857 = vadd.f32 %v844, %v78
    %v858 = vadd.f32 %v845, %v79
    %v859 = vtanh.pop %v846
    %v860 = vtanh.pop %v847
    %v861 = vtanh.pop %v848
    %v862 = vtanh.pop %v849
    %v863 = vtanh.pop %v850
    %v864 = vtanh.pop %v851
    %v865 = vtanh.pop %v852
    %v866 = vtanh.pop %v853
    %v867 = vtanh.pop %v854
    %v868 = vtanh.pop %v855
    %v869 = vtanh.pop %v856
    %v870 = vtanh.pop %v857
    %v871 = vtanh.pop %v858
    %872 = vmatpush.msra.mxu0 0.0
    %873 = vmatpush.msra.mxu0 0.0
    %874 = vmatpush.msra.mxu0 0.0
    %875 = vmatpush.msra.mxu0 %v871
    %876 = vmatpush.msra.mxu0 %v870
    %877 = vmatpush.msra.mxu0 %v869
    %878 = vmatpush.msra.mxu0 %v868
    %879 = vmatpush.msra.mxu0 %v867
    %880 = vmatpush.msra.mxu0 %v866
    %881 = vmatpush.msra.mxu0 %v865
    %882 = vmatpush.msra.mxu0 %v864
    %883 = vmatpush.msra.mxu0 %v863
    %884 = vmatpush.msra.mxu0 %v862
    %885 = vmatpush.msra.mxu0 %v861
    %886 = vmatpush.msra.mxu0 %v860
    %887 = vmatpush.msra.mxu0 %v859
    %888 = vmatmul.f32.gmra.mxu0 %v126
    %v889 = vpop.f32.mrf.mxu0
    %v890 = vadd.f32 %v123, %v889
    %891 = vdwg.mxu0
    %892 = vst [vmem:[#allocation8 + $0xc] sm:$0x1] %v890
    %v893 = vld [vmem:[%s0 + $0xd] sm:$0x1]
    %v894 = vperm.slane %v893, 0
    %v895 = vmul.f32 %v894, %v54
    %v896 = vmul.f32 %v894, %v55
    %v897 = vmul.f32 %v894, %v56
    %v898 = vmul.f32 %v894, %v57
    %v899 = vmul.f32 %v894, %v58
    %v900 = vmul.f32 %v894, %v59
    %v901 = vmul.f32 %v894, %v60
    %v902 = vmul.f32 %v894, %v61
    %v903 = vmul.f32 %v894, %v62
    %v904 = vmul.f32 %v894, %v63
    %v905 = vmul.f32 %v894, %v64
    %v906 = vmul.f32 %v894, %v65
    %v907 = vmul.f32 %v894, %v66
    %v908 = vadd.f32 %v895, %v67
    %v909 = vadd.f32 %v896, %v68
    %v910 = vadd.f32 %v897, %v69
    %v911 = vadd.f32 %v898, %v70
    %v912 = vadd.f32 %v899, %v71
    %v913 = vadd.f32 %v900, %v72
    %v914 = vadd.f32 %v901, %v73
    %v915 = vadd.f32 %v902, %v74
    %v916 = vadd.f32 %v903, %v75
    %v917 = vadd.f32 %v904, %v76
    %v918 = vadd.f32 %v905, %v77
    %v919 = vadd.f32 %v906, %v78
    %v920 = vadd.f32 %v907, %v79
    %v921 = vtanh.pop %v908
    %v922 = vtanh.pop %v909
    %v923 = vtanh.pop %v910
    %v924 = vtanh.pop %v911
    %v925 = vtanh.pop %v912
    %v926 = vtanh.pop %v913
    %v927 = vtanh.pop %v914
    %v928 = vtanh.pop %v915
    %v929 = vtanh.pop %v916
    %v930 = vtanh.pop %v917
    %v931 = vtanh.pop %v918
    %v932 = vtanh.pop %v919
    %v933 = vtanh.pop %v920
    %934 = vmatpush.msra.mxu0 0.0
    %935 = vmatpush.msra.mxu0 0.0
    %936 = vmatpush.msra.mxu0 0.0
    %937 = vmatpush.msra.mxu0 %v933
    %938 = vmatpush.msra.mxu0 %v932
    %939 = vmatpush.msra.mxu0 %v931
    %940 = vmatpush.msra.mxu0 %v930
    %941 = vmatpush.msra.mxu0 %v929
    %942 = vmatpush.msra.mxu0 %v928
    %943 = vmatpush.msra.mxu0 %v927
    %944 = vmatpush.msra.mxu0 %v926
    %945 = vmatpush.msra.mxu0 %v925
    %946 = vmatpush.msra.mxu0 %v924
    %947 = vmatpush.msra.mxu0 %v923
    %948 = vmatpush.msra.mxu0 %v922
    %949 = vmatpush.msra.mxu0 %v921
    %950 = vmatmul.f32.gmra.mxu0 %v126
    %v951 = vpop.f32.mrf.mxu0
    %v952 = vadd.f32 %v123, %v951
    %953 = vdwg.mxu0
    %954 = vst [vmem:[#allocation8 + $0xd] sm:$0x1] %v952
    %v955 = vld [vmem:[%s0 + $0xe] sm:$0x1]
    %v956 = vperm.slane %v955, 0
    %v957 = vmul.f32 %v956, %v54
    %v958 = vmul.f32 %v956, %v55
    %v959 = vmul.f32 %v956, %v56
    %v960 = vmul.f32 %v956, %v57
    %v961 = vmul.f32 %v956, %v58
    %v962 = vmul.f32 %v956, %v59
    %v963 = vmul.f32 %v956, %v60
    %v964 = vmul.f32 %v956, %v61
    %v965 = vmul.f32 %v956, %v62
    %v966 = vmul.f32 %v956, %v63
    %v967 = vmul.f32 %v956, %v64
    %v968 = vmul.f32 %v956, %v65
    %v969 = vmul.f32 %v956, %v66
    %v970 = vadd.f32 %v957, %v67
    %v971 = vadd.f32 %v958, %v68
    %v972 = vadd.f32 %v959, %v69
    %v973 = vadd.f32 %v960, %v70
    %v974 = vadd.f32 %v961, %v71
    %v975 = vadd.f32 %v962, %v72
    %v976 = vadd.f32 %v963, %v73
    %v977 = vadd.f32 %v964, %v74
    %v978 = vadd.f32 %v965, %v75
    %v979 = vadd.f32 %v966, %v76
    %v980 = vadd.f32 %v967, %v77
    %v981 = vadd.f32 %v968, %v78
    %v982 = vadd.f32 %v969, %v79
    %v983 = vtanh.pop %v970
    %v984 = vtanh.pop %v971
    %v985 = vtanh.pop %v972
    %v986 = vtanh.pop %v973
    %v987 = vtanh.pop %v974
    %v988 = vtanh.pop %v975
    %v989 = vtanh.pop %v976
    %v990 = vtanh.pop %v977
    %v991 = vtanh.pop %v978
    %v992 = vtanh.pop %v979
    %v993 = vtanh.pop %v980
    %v994 = vtanh.pop %v981
    %v995 = vtanh.pop %v982
    %996 = vmatpush.msra.mxu0 0.0
    %997 = vmatpush.msra.mxu0 0.0
    %998 = vmatpush.msra.mxu0 0.0
    %999 = vmatpush.msra.mxu0 %v995
    %1000 = vmatpush.msra.mxu0 %v994
    %1001 = vmatpush.msra.mxu0 %v993
    %1002 = vmatpush.msra.mxu0 %v992
    %1003 = vmatpush.msra.mxu0 %v991
    %1004 = vmatpush.msra.mxu0 %v990
    %1005 = vmatpush.msra.mxu0 %v989
    %1006 = vmatpush.msra.mxu0 %v988
    %1007 = vmatpush.msra.mxu0 %v987
    %1008 = vmatpush.msra.mxu0 %v986
    %1009 = vmatpush.msra.mxu0 %v985
    %1010 = vmatpush.msra.mxu0 %v984
    %1011 = vmatpush.msra.mxu0 %v983
    %1012 = vmatmul.f32.gmra.mxu0 %v126
    %v1013 = vpop.f32.mrf.mxu0
    %v1014 = vadd.f32 %v123, %v1013
    %1015 = vdwg.mxu0
    %1016 = vst [vmem:[#allocation8 + $0xe] sm:$0x1] %v1014
    %v1017 = vld [vmem:[%s0 + $0xf] sm:$0x1]
    %v1018 = vperm.slane %v1017, 0
    %v1019 = vmul.f32 %v1018, %v54
    %v1020 = vmul.f32 %v1018, %v55
    %v1021 = vmul.f32 %v1018, %v56
    %v1022 = vmul.f32 %v1018, %v57
    %v1023 = vmul.f32 %v1018, %v58
    %v1024 = vmul.f32 %v1018, %v59
    %v1025 = vmul.f32 %v1018, %v60
    %v1026 = vmul.f32 %v1018, %v61
    %v1027 = vmul.f32 %v1018, %v62
    %v1028 = vmul.f32 %v1018, %v63
    %v1029 = vmul.f32 %v1018, %v64
    %v1030 = vmul.f32 %v1018, %v65
    %v1031 = vmul.f32 %v1018, %v66
    %v1032 = vadd.f32 %v1019, %v67
    %v1033 = vadd.f32 %v1020, %v68
    %v1034 = vadd.f32 %v1021, %v69
    %v1035 = vadd.f32 %v1022, %v70
    %v1036 = vadd.f32 %v1023, %v71
    %v1037 = vadd.f32 %v1024, %v72
    %v1038 = vadd.f32 %v1025, %v73
    %v1039 = vadd.f32 %v1026, %v74
    %v1040 = vadd.f32 %v1027, %v75
    %v1041 = vadd.f32 %v1028, %v76
    %v1042 = vadd.f32 %v1029, %v77
    %v1043 = vadd.f32 %v1030, %v78
    %v1044 = vadd.f32 %v1031, %v79
    %v1045 = vtanh.pop %v1032
    %v1046 = vtanh.pop %v1033
    %v1047 = vtanh.pop %v1034
    %v1048 = vtanh.pop %v1035
    %v1049 = vtanh.pop %v1036
    %v1050 = vtanh.pop %v1037
    %v1051 = vtanh.pop %v1038
    %v1052 = vtanh.pop %v1039
    %v1053 = vtanh.pop %v1040
    %v1054 = vtanh.pop %v1041
    %v1055 = vtanh.pop %v1042
    %v1056 = vtanh.pop %v1043
    %v1057 = vtanh.pop %v1044
    %1058 = vmatpush.msra.mxu0 0.0
    %1059 = vmatpush.msra.mxu0 0.0
    %1060 = vmatpush.msra.mxu0 0.0
    %1061 = vmatpush.msra.mxu0 %v1057
    %1062 = vmatpush.msra.mxu0 %v1056
    %1063 = vmatpush.msra.mxu0 %v1055
    %1064 = vmatpush.msra.mxu0 %v1054
    %1065 = vmatpush.msra.mxu0 %v1053
    %1066 = vmatpush.msra.mxu0 %v1052
    %1067 = vmatpush.msra.mxu0 %v1051
    %1068 = vmatpush.msra.mxu0 %v1050
    %1069 = vmatpush.msra.mxu0 %v1049
    %1070 = vmatpush.msra.mxu0 %v1048
    %1071 = vmatpush.msra.mxu0 %v1047
    %1072 = vmatpush.msra.mxu0 %v1046
    %1073 = vmatpush.msra.mxu0 %v1045
    %1074 = vmatmul.f32.gmra.mxu0 %v126
    %v1075 = vpop.f32.mrf.mxu0
    %v1076 = vadd.f32 %v123, %v1075
    %1077 = vdwg.mxu0
    %1078 = vst [vmem:[#allocation8 + $0xf] sm:$0x1] %v1076
    // Predicated region
    $region30: #{ffnn_forward.1} parent=1 // pred_check
      _
    $region31: #{ffnn_forward.1} parent=1 // pred_check_branch
      %1080 = sbr.rel (0) target = $region33
    $region32: #{ffnn_forward.1} parent=1 // pred_region
      %1082 = vsyncadd [#allocation5], 0
      %s1083 = sshll.u32 [#allocation8], 4
      %s1084 = int_to_ptr.vmem [resolvable:$true] %s1083
      %s1085 = sshll.u32 %s5, 4
      %s1086 = int_to_ptr.hbm [resolvable:$true] %s1085
      %1091 = dma.vmem_to_hbm [thread:$0]  %s1084, 256, %s1086, [#allocation5], 128, 128, 8
    $region33: #{ffnn_forward.1} parent=1 // pred_fallthru
      _
    // Predicated region
    $region34: #{ffnn_forward.1} parent=1 // pred_check
      _
    $region35: #{ffnn_forward.1} parent=1 // pred_check_branch
      %1093 = sbr.rel (0) target = $region37
    $region36: #{ffnn_forward.1} parent=1 // pred_region
      %1095 = dma.done [#allocation5], 256
    $region37: #{ffnn_forward.1} parent=1 // pred_fallthru
      _
    %1096 = vsyncpa [#allocation4], 1
    %1097 = vsyncpa [#allocation7], 1
    %1098 = vsyncpa [#allocation5], 1

</llo_original>
